<compile_context>
chip_gen: v6e
topology: v6e:2x2x1
jax: 0.10.0
libtpu: 0.0.40
codegen_flags: <defaults>
</compile_context>

<pallas_src>
import jax
import jax.numpy as jnp
import numpy as np
from jax.experimental import pallas as pl
from jax.experimental.pallas import tpu as pltpu


# --------------------------------------------------------------------------
# Pass 1: per-segment sums -> per-segment effective bias.
# --------------------------------------------------------------------------
def _segment_bias_kernel(x_ref, starts_ref, ends_ref, inv_cnt_ref,
                         w2_ref, b2_ref, w1b_ref, b1_ref,
                         bias_ref, acc_ref):
    pid = pl.program_id(0)
    t = x_ref.shape[0]

    @pl.when(pid == 0)
    def _():
        acc_ref[...] = jnp.zeros_like(acc_ref)

    # One-hot segment membership, built transposed ([B_pad, T]) so the
    # segment reduction is a single standard MXU matmul: onehot @ x -> [B_pad, C].
    row = jax.lax.broadcasted_iota(jnp.int32, (1, t), 1) + pid * t       # [1, T]
    onehot = jnp.logical_and(row >= starts_ref[...],
                             row < ends_ref[...]).astype(jnp.float32)    # [B_pad, T]
    acc_ref[...] += jnp.dot(onehot, x_ref[...],
                            preferred_element_type=jnp.float32)          # [B_pad, C]

    @pl.when(pid == pl.num_programs(0) - 1)
    def _():
        seg_mean = acc_ref[...] * inv_cnt_ref[...]                       # [B_pad, C]
        g = jnp.dot(seg_mean, w2_ref[...],
                    preferred_element_type=jnp.float32) + b2_ref[...]
        g = jnp.maximum(g, 0.0)                                          # linear2 ReLU
        bias_ref[...] = (jnp.dot(g, w1b_ref[...],
                                 preferred_element_type=jnp.float32)
                         + b1_ref[...])                                  # folds b1 too


# --------------------------------------------------------------------------
# Pass 2: x @ W1a + per-segment bias, LayerNorm, ReLU.
# --------------------------------------------------------------------------
def _apply_kernel(x_ref, starts_ref, ends_ref, bias_ref,
                  w1a_ref, gamma_ref, beta_ref, out_ref):
    pid = pl.program_id(0)
    t = x_ref.shape[0]

    row = jax.lax.broadcasted_iota(jnp.int32, (t, 1), 0) + pid * t       # [T, 1]
    onehot = jnp.logical_and(row >= starts_ref[...],
                             row < ends_ref[...]).astype(jnp.float32)    # [T, B_pad]
    bias_rows = jnp.dot(onehot, bias_ref[...],
                        preferred_element_type=jnp.float32)              # [T, C]

    h = jnp.dot(x_ref[...], w1a_ref[...],
                preferred_element_type=jnp.float32) + bias_rows
    mu = jnp.mean(h, axis=-1, keepdims=True)
    var = jnp.mean((h - mu) ** 2, axis=-1, keepdims=True)
    h = (h - mu) * jax.lax.rsqrt(var + 1e-5) * gamma_ref[...] + beta_ref[...]
    out_ref[...] = jnp.maximum(h, 0.0)


# --------------------------------------------------------------------------
# Wrapper.
# --------------------------------------------------------------------------
def transition_up(x, offsets, params, *, row_tile=512):
    """x: [N, C] f32, offsets: [B] int32 cumulative counts.

    params: (w2, b2, w1a, w1b, b1, gamma, beta), weights pre-transposed
    [in, out]; w1a / w1b are the x-half / global-half of linear1's weight.
    """
    n, c = x.shape
    b = offsets.shape[0]
    w2, b2, w1a, w1b, b1, gamma, beta = params

    # --- padded sizes --------------------------------------------------
    b_pad = max(8, ((b + 7) // 8) * 8)
    t = row_tile if n >= row_tile else ((n + 7) // 8) * 8
    n_pad = ((n + t - 1) // t) * t
    num_tiles = n_pad // t

    x_p = jnp.pad(x, ((0, n_pad - n), (0, 0))) if n_pad != n else x

    # --- segment boundary metadata (host/XLA side, independent of x) ---
    ends = offsets.astype(jnp.int32)
    starts = jnp.concatenate([jnp.zeros((1,), jnp.int32), ends[:-1]])
    last = ends[-1]
    ends_p = jnp.concatenate([ends, jnp.full((b_pad - b,), last, jnp.int32)])
    starts_p = jnp.concatenate([starts, jnp.full((b_pad - b,), last, jnp.int32)])
    # guard empty segments (cnt==0) against divide-by-zero
    inv_cnt = (1.0 / jnp.maximum(ends_p - starts_p, 1).astype(jnp.float32))[:, None]
    starts_col, ends_col = starts_p[:, None], ends_p[:, None]     # [B_pad, 1]
    starts_row, ends_row = starts_p[None, :], ends_p[None, :]     # [1, B_pad]

    full = lambda shape: pl.BlockSpec(shape, lambda i: (0, 0))
    tile = pl.BlockSpec((t, c), lambda i: (i, 0))
    vmem_limit = 32 * 1024 * 1024

    # --- pass 1: per-segment effective bias -----------------------------
    cost1 = pl.CostEstimate(
        flops=2 * n_pad * b_pad * c + 4 * b_pad * c * c,
        transcendentals=0,
        bytes_accessed=n_pad * c * 4 + 2 * c * c * 4 + 3 * b_pad * c * 4)
    bias = pl.pallas_call(
        _segment_bias_kernel,
        out_shape=jax.ShapeDtypeStruct((b_pad, c), jnp.float32),
        grid=(num_tiles,),
        in_specs=[tile,                       # x
                  full((b_pad, 1)),           # starts (col)
                  full((b_pad, 1)),           # ends   (col)
                  full((b_pad, 1)),           # 1/cnt
                  full((c, c)),               # w2
                  full((1, c)),               # b2
                  full((c, c)),               # w1b
                  full((1, c))],              # b1
        out_specs=full((b_pad, c)),
        scratch_shapes=[pltpu.VMEM((b_pad, c), jnp.float32)],
        compiler_params=pltpu.CompilerParams(
            dimension_semantics=("arbitrary",),
            vmem_limit_bytes=vmem_limit),
        cost_estimate=cost1,
    )(x_p, starts_col, ends_col, inv_cnt, w2, b2, w1b, b1)

    # --- pass 2: apply linear1 + LayerNorm + ReLU per row tile -----------
    cost2 = pl.CostEstimate(
        flops=2 * n_pad * c * c + 2 * n_pad * b_pad * c + 10 * n_pad * c,
        transcendentals=n_pad,
        bytes_accessed=2 * n_pad * c * 4 + c * c * 4 + b_pad * c * 4)
    out_p = pl.pallas_call(
        _apply_kernel,
        out_shape=jax.ShapeDtypeStruct((n_pad, c), jnp.float32),
        grid=(num_tiles,),
        in_specs=[tile,                       # x
                  full((1, b_pad)),           # starts (row)
                  full((1, b_pad)),           # ends   (row)
                  full((b_pad, c)),           # per-segment bias
                  full((c, c)),               # w1a
                  full((1, c)),               # gamma
                  full((1, c))],              # beta
        out_specs=tile,
        compiler_params=pltpu.CompilerParams(
            dimension_semantics=("parallel",),
            vmem_limit_bytes=vmem_limit),
        cost_estimate=cost2,
    )(x_p, starts_row, ends_row, bias, w1a, gamma, beta)

    return out_p[:n] if n_pad != n else out_p


# --------------------------------------------------------------------------
# Pure-JAX reference mirroring the PyTorch forward (pxo2 is None).
# --------------------------------------------------------------------------
def transition_up_ref(x, offsets, params):
    w2, b2, w1a, w1b, b1, gamma, beta = params
    n = x.shape[0]
    row = jnp.arange(n)[:, None]
    glob = jnp.zeros_like(x)
    start = 0
    for i in range(offsets.shape[0]):
        end = offsets[i]
        cnt = (end - start).astype(x.dtype)
        mask = ((row >= start) & (row < end)).astype(x.dtype)
        mean = jnp.sum(x * mask, axis=0, keepdims=True) / cnt
        g = jnp.maximum(mean @ w2 + b2, 0.0)
        glob = glob + mask * g
        start = end
    h = x @ w1a + glob @ w1b + b1
    mu = jnp.mean(h, axis=-1, keepdims=True)
    var = jnp.mean((h - mu) ** 2, axis=-1, keepdims=True)
    h = (h - mu) * jax.lax.rsqrt(var + 1e-5) * gamma + beta
    return jnp.maximum(h, 0.0)


if __name__ == "__main__":
    key = jax.random.PRNGKey(0)
    C = 32          # in_planes
    N = 16          # total number of points
    offsets = jnp.array([8, 16], dtype=jnp.int32)   # 2 batch segments

    ks = jax.random.split(key, 8)
    x = jax.random.normal(ks[0], (N, C), dtype=jnp.float32)

    # linear2: Linear(C, C) + ReLU        (weights stored pre-transposed [in, out])
    w2 = jax.random.normal(ks[1], (C, C), dtype=jnp.float32) * 0.1
    b2 = jax.random.normal(ks[2], (1, C), dtype=jnp.float32) * 0.1
    # linear1: Linear(2C, C) split into the x-half and the global-feature half.
    w1a = jax.random.normal(ks[3], (C, C), dtype=jnp.float32) * 0.1
    w1b = jax.random.normal(ks[4], (C, C), dtype=jnp.float32) * 0.1
    b1 = jax.random.normal(ks[5], (1, C), dtype=jnp.float32) * 0.1
    # LayerNorm(C) affine params.
    gamma = jnp.ones((1, C), dtype=jnp.float32)
    beta = jnp.zeros((1, C), dtype=jnp.float32)

    params = (w2, b2, w1a, w1b, b1, gamma, beta)

    out = transition_up(x, offsets, params)
    out = jax.block_until_ready(out)

    expected = transition_up_ref(x, offsets, params)
    np.testing.assert_allclose(np.asarray(out), np.asarray(expected),
                               rtol=1e-5, atol=1e-5)
    print("KERNEL_OK")
</pallas_src>

<mosaic_0001>
module attributes {stable_mosaic.version = 11 : i64} {
  func.func @_segment_bias_kernel(%arg0: i32, %arg1: memref<16x32xf32, #tpu.memory_space<vmem>>, %arg2: memref<8x1xi32, #tpu.memory_space<vmem>>, %arg3: memref<8x1xi32, #tpu.memory_space<vmem>>, %arg4: memref<8x1xf32, #tpu.memory_space<vmem>>, %arg5: memref<32x32xf32, #tpu.memory_space<vmem>>, %arg6: memref<1x32xf32, #tpu.memory_space<vmem>>, %arg7: memref<32x32xf32, #tpu.memory_space<vmem>>, %arg8: memref<1x32xf32, #tpu.memory_space<vmem>>, %arg9: memref<8x32xf32, #tpu.memory_space<vmem>>, %arg10: memref<8x32xf32, #tpu.memory_space<vmem>>) attributes {dimension_semantics = [#tpu.dimension_semantics<arbitrary>], iteration_bounds = array<i64: 1>, scalar_prefetch = 0 : i64, scratch_operands = 1 : i64, tpu.core_type = #tpu.core_type<tc>, window_params = [{transform_indices = @transform_0, window_bounds = array<i64: 16, 32>}, {pipeline_mode = #tpu.pipeline_mode<synchronous>, transform_indices = @transform_1, window_bounds = array<i64: 8, 1>}, {pipeline_mode = #tpu.pipeline_mode<synchronous>, transform_indices = @transform_2, window_bounds = array<i64: 8, 1>}, {pipeline_mode = #tpu.pipeline_mode<synchronous>, transform_indices = @transform_3, window_bounds = array<i64: 8, 1>}, {pipeline_mode = #tpu.pipeline_mode<synchronous>, transform_indices = @transform_4, window_bounds = array<i64: 32, 32>}, {pipeline_mode = #tpu.pipeline_mode<synchronous>, transform_indices = @transform_5, window_bounds = array<i64: 1, 32>}, {pipeline_mode = #tpu.pipeline_mode<synchronous>, transform_indices = @transform_6, window_bounds = array<i64: 32, 32>}, {pipeline_mode = #tpu.pipeline_mode<synchronous>, transform_indices = @transform_7, window_bounds = array<i64: 1, 32>}, {pipeline_mode = #tpu.pipeline_mode<synchronous>, transform_indices = @transform_8, window_bounds = array<i64: 8, 32>}]} {
    %c0_i32 = arith.constant 0 : i32
    %0 = arith.cmpi eq, %arg0, %c0_i32 : i32
    %1 = arith.extui %0 : i1 to i32
    %c0_i32_0 = arith.constant 0 : i32
    %2 = arith.cmpi ne, %1, %c0_i32_0 : i32
    scf.if %2 {
      %cst_12 = arith.constant 0.000000e+00 : f32
      %26 = vector.broadcast %cst_12 : f32 to vector<8x32xf32>
      %c0_13 = arith.constant 0 : index
      %c0_14 = arith.constant 0 : index
      %27 = vector.load %arg10[%c0_13, %c0_14] : memref<8x32xf32, #tpu.memory_space<vmem>>, vector<8x32xf32>
      tpu.vector_store %arg10[%c0_13, %c0_14], %26 {strides = array<i32>} : memref<8x32xf32, #tpu.memory_space<vmem>>, vector<8x32xf32>,
    } else {
    }
    %3 = tpu.iota {dimensions = array<i32: 1>} : vector<1x16xi32>
    %c16_i32 = arith.constant 16 : i32
    %4 = arith.muli %arg0, %c16_i32 : i32
    %5 = vector.broadcast %4 : i32 to vector<1x16xi32>
    %6 = arith.addi %3, %5 : vector<1x16xi32>
    %c0 = arith.constant 0 : index
    %c0_1 = arith.constant 0 : index
    %7 = vector.load %arg2[%c0, %c0_1] : memref<8x1xi32, #tpu.memory_space<vmem>>, vector<8x1xi32>
    %8 = vector.broadcast %6 : vector<1x16xi32> to vector<8x16xi32>
    %9 = vector.broadcast %7 : vector<8x1xi32> to vector<8x16xi32>
    %10 = arith.cmpi sge, %8, %9 : vector<8x16xi32>
    %c0_2 = arith.constant 0 : index
    %c0_3 = arith.constant 0 : index
    %11 = vector.load %arg3[%c0_2, %c0_3] : memref<8x1xi32, #tpu.memory_space<vmem>>, vector<8x1xi32>
    %12 = vector.broadcast %6 : vector<1x16xi32> to vector<8x16xi32>
    %13 = vector.broadcast %11 : vector<8x1xi32> to vector<8x16xi32>
    %14 = arith.cmpi slt, %12, %13 : vector<8x16xi32>
    %15 = arith.andi %10, %14 : vector<8x16xi1>
    %16 = arith.extui %15 : vector<8x16xi1> to vector<8x16xi32>
    %17 = arith.sitofp %16 : vector<8x16xi32> to vector<8x16xf32>
    %c0_4 = arith.constant 0 : index
    %c0_5 = arith.constant 0 : index
    %18 = vector.load %arg10[%c0_4, %c0_5] : memref<8x32xf32, #tpu.memory_space<vmem>>, vector<8x32xf32>
    %c0_6 = arith.constant 0 : index
    %c0_7 = arith.constant 0 : index
    %19 = vector.load %arg1[%c0_6, %c0_7] : memref<16x32xf32, #tpu.memory_space<vmem>>, vector<16x32xf32>
    %cst = arith.constant dense<0.000000e+00> : vector<8x32xf32>
    %20 = tpu.matmul %17, %19, %cst {dimension_numbers = #tpu.dot_dimension_numbers<[1], [0], [0], [1], [0, 0, 1, 1], [], []>} : vector<8x16xf32>, vector<16x32xf32>, vector<8x32xf32> -> vector<8x32xf32>
    %21 = arith.addf %18, %20 : vector<8x32xf32>
    %c0_8 = arith.constant 0 : index
    %c0_9 = arith.constant 0 : index
    %22 = vector.load %arg10[%c0_8, %c0_9] : memref<8x32xf32, #tpu.memory_space<vmem>>, vector<8x32xf32>
    tpu.vector_store %arg10[%c0_8, %c0_9], %21 {strides = array<i32>} : memref<8x32xf32, #tpu.memory_space<vmem>>, vector<8x32xf32>,
    %c0_i32_10 = arith.constant 0 : i32
    %23 = arith.cmpi eq, %arg0, %c0_i32_10 : i32
    %24 = arith.extui %23 : i1 to i32
    %c0_i32_11 = arith.constant 0 : i32
    %25 = arith.cmpi ne, %24, %c0_i32_11 : i32
    scf.if %25 {
      %c0_12 = arith.constant 0 : index
      %c0_13 = arith.constant 0 : index
      %26 = vector.load %arg10[%c0_12, %c0_13] : memref<8x32xf32, #tpu.memory_space<vmem>>, vector<8x32xf32>
      %c0_14 = arith.constant 0 : index
      %c0_15 = arith.constant 0 : index
      %27 = vector.load %arg4[%c0_14, %c0_15] : memref<8x1xf32, #tpu.memory_space<vmem>>, vector<8x1xf32>
      %28 = vector.broadcast %27 : vector<8x1xf32> to vector<8x32xf32>
      %29 = arith.mulf %26, %28 : vector<8x32xf32>
      %c0_16 = arith.constant 0 : index
      %c0_17 = arith.constant 0 : index
      %30 = vector.load %arg5[%c0_16, %c0_17] : memref<32x32xf32, #tpu.memory_space<vmem>>, vector<32x32xf32>
      %cst_18 = arith.constant dense<0.000000e+00> : vector<8x32xf32>
      %31 = tpu.matmul %29, %30, %cst_18 {dimension_numbers = #tpu.dot_dimension_numbers<[1], [0], [0], [1], [0, 0, 1, 1], [], []>} : vector<8x32xf32>, vector<32x32xf32>, vector<8x32xf32> -> vector<8x32xf32>
      %c0_19 = arith.constant 0 : index
      %c0_20 = arith.constant 0 : index
      %32 = vector.load %arg6[%c0_19, %c0_20] : memref<1x32xf32, #tpu.memory_space<vmem>>, vector<1x32xf32>
      %33 = vector.broadcast %32 : vector<1x32xf32> to vector<8x32xf32>
      %34 = arith.addf %31, %33 : vector<8x32xf32>
      %cst_21 = arith.constant 0.000000e+00 : f32
      %35 = vector.broadcast %cst_21 : f32 to vector<8x32xf32>
      %36 = arith.maximumf %34, %35 : vector<8x32xf32>
      %c0_22 = arith.constant 0 : index
      %c0_23 = arith.constant 0 : index
      %37 = vector.load %arg7[%c0_22, %c0_23] : memref<32x32xf32, #tpu.memory_space<vmem>>, vector<32x32xf32>
      %cst_24 = arith.constant dense<0.000000e+00> : vector<8x32xf32>
      %38 = tpu.matmul %36, %37, %cst_24 {dimension_numbers = #tpu.dot_dimension_numbers<[1], [0], [0], [1], [0, 0, 1, 1], [], []>} : vector<8x32xf32>, vector<32x32xf32>, vector<8x32xf32> -> vector<8x32xf32>
      %c0_25 = arith.constant 0 : index
      %c0_26 = arith.constant 0 : index
      %39 = vector.load %arg8[%c0_25, %c0_26] : memref<1x32xf32, #tpu.memory_space<vmem>>, vector<1x32xf32>
      %40 = vector.broadcast %39 : vector<1x32xf32> to vector<8x32xf32>
      %41 = arith.addf %38, %40 : vector<8x32xf32>
      %c0_27 = arith.constant 0 : index
      %c0_28 = arith.constant 0 : index
      %42 = vector.load %arg9[%c0_27, %c0_28] : memref<8x32xf32, #tpu.memory_space<vmem>>, vector<8x32xf32>
      tpu.vector_store %arg9[%c0_27, %c0_28], %41 {strides = array<i32>} : memref<8x32xf32, #tpu.memory_space<vmem>>, vector<8x32xf32>,
    } else {
    }
    return
  }
  func.func @transform_0(%arg0: i32) -> (i32, i32) {
    %c0_i32 = arith.constant 0 : i32
    %c0_i32_0 = arith.constant 0 : i32
    return %arg0, %c0_i32 : i32, i32
  }
  func.func @transform_1(%arg0: i32) -> (i32, i32) {
    %c0_i32 = arith.constant 0 : i32
    %c0_i32_0 = arith.constant 0 : i32
    %c0_i32_1 = arith.constant 0 : i32
    return %c0_i32, %c0_i32_0 : i32, i32
  }
  func.func @transform_2(%arg0: i32) -> (i32, i32) {
    %c0_i32 = arith.constant 0 : i32
    %c0_i32_0 = arith.constant 0 : i32
    %c0_i32_1 = arith.constant 0 : i32
    return %c0_i32, %c0_i32_0 : i32, i32
  }
  func.func @transform_3(%arg0: i32) -> (i32, i32) {
    %c0_i32 = arith.constant 0 : i32
    %c0_i32_0 = arith.constant 0 : i32
    %c0_i32_1 = arith.constant 0 : i32
    return %c0_i32, %c0_i32_0 : i32, i32
  }
  func.func @transform_4(%arg0: i32) -> (i32, i32) {
    %c0_i32 = arith.constant 0 : i32
    %c0_i32_0 = arith.constant 0 : i32
    %c0_i32_1 = arith.constant 0 : i32
    return %c0_i32, %c0_i32_0 : i32, i32
  }
  func.func @transform_5(%arg0: i32) -> (i32, i32) {
    %c0_i32 = arith.constant 0 : i32
    %c0_i32_0 = arith.constant 0 : i32
    %c0_i32_1 = arith.constant 0 : i32
    return %c0_i32, %c0_i32_0 : i32, i32
  }
  func.func @transform_6(%arg0: i32) -> (i32, i32) {
    %c0_i32 = arith.constant 0 : i32
    %c0_i32_0 = arith.constant 0 : i32
    %c0_i32_1 = arith.constant 0 : i32
    return %c0_i32, %c0_i32_0 : i32, i32
  }
  func.func @transform_7(%arg0: i32) -> (i32, i32) {
    %c0_i32 = arith.constant 0 : i32
    %c0_i32_0 = arith.constant 0 : i32
    %c0_i32_1 = arith.constant 0 : i32
    return %c0_i32, %c0_i32_0 : i32, i32
  }
  func.func @transform_8(%arg0: i32) -> (i32, i32) {
    %c0_i32 = arith.constant 0 : i32
    %c0_i32_0 = arith.constant 0 : i32
    %c0_i32_1 = arith.constant 0 : i32
    return %c0_i32, %c0_i32_0 : i32, i32
  }
}

</mosaic_0001>

<llo_original>
// kernel: tpu_custom_call.1
$region0: #{tpu_custom_call.1}
  #allocation0 [shape = 'u32[]', space=smem, size = 0x4, offset = 0x4, fixed_abs, tag = 'smem constant byte address 0x4 - core index']
  #allocation1 [shape = 'u32[144,128]{1,0:T(1,128)}', space=vmem, size = 0x12000, scoped, tag = 'internal scratch']
  #allocation2 [shape = 'f32[8,32]{1,0:T(8,128)}', space=vmem, size = 0x1000, scoped, tag = 'scratch operand']
  %s0 = inlined_call_operand.hbm [shape: f32[16,32], index: 0, kind: input, shape index: {}]
  %s1 = inlined_call_operand.vmem [shape: s32[8,1], index: 1, kind: input, shape index: {}]
  %s2 = inlined_call_operand.vmem [shape: s32[8,1], index: 2, kind: input, shape index: {}]
  %s3 = inlined_call_operand.vmem [shape: f32[8,1], index: 3, kind: input, shape index: {}]
  %s4 = inlined_call_operand.vmem [shape: f32[32,32], index: 4, kind: input, shape index: {}]
  %s5 = inlined_call_operand.vmem [shape: f32[1,32], index: 5, kind: input, shape index: {}]
  %s6 = inlined_call_operand.hbm [shape: f32[32,32], index: 6, kind: input, shape index: {}]
  %s7 = inlined_call_operand.vmem [shape: f32[1,32], index: 7, kind: input, shape index: {}]
  %s8 = inlined_call_operand.hbm [shape: f32[8,32], index: 8, kind: output, shape index: {}]
  %s9 = sld [smem:[#allocation0]]
  $region58: #{tpu_custom_call.1} parent=0
    _
  %s11 = ssub.s32 1, %s9
  %s12 = scalar_select 0, %s11, %s9
  $region1: #{tpu_custom_call.1} parent=0
    #allocation3 [shape = 'u8[8192]{0}', space=vmem, size = 0x2000, scoped, tag = 'input window, operand 0, single buffered']
    #allocation4 [shape = 's32[1]{0}', space=sflag, size = 0x4, scoped, tag = 'scoped memory for tpu_custom_call.1']
    #allocation5 [shape = 's32[1]{0}', space=sflag, size = 0x4, scoped, tag = 'scoped memory for tpu_custom_call.1']
    #allocation6 [shape = 'u8[16384]{0}', space=vmem, size = 0x4000, scoped, tag = 'input window, operand 6, single buffered']
    #allocation7 [shape = 's32[1]{0}', space=sflag, size = 0x4, scoped, tag = 'scoped memory for tpu_custom_call.1']
    #allocation8 [shape = 'u8[4096]{0}', space=vmem, size = 0x1000, scoped, tag = 'output window, operand 0, single buffered']
    %13 = vsyncpa [#allocation4], 0
    %14 = vsyncpa [#allocation7], 0
    %15 = vsyncpa [#allocation5], 0
    // Predicated region
    $region2: #{tpu_custom_call.1} parent=1 // pred_check
      _
    $region3: #{tpu_custom_call.1} parent=1 // pred_check_branch
      %17 = sbr.rel (0) target = $region5
    $region4: #{tpu_custom_call.1} parent=1 // pred_region
      %s19 = ssub.s32 256, 256
      %20 = vsyncadd [#allocation4], %s19
      %s21 = sshll.u32 [#allocation3], 4
      %s22 = int_to_ptr.vmem [resolvable:$true] %s21
      %27 = dma.hbm_to_vmem [thread:$0]  %s0, 256, %s22, [#allocation4], 128, 128, 8
    $region5: #{tpu_custom_call.1} parent=1 // pred_fallthru
      _
    // Predicated region
    $region6: #{tpu_custom_call.1} parent=1 // pred_check
      _
    $region7: #{tpu_custom_call.1} parent=1 // pred_check_branch
      %29 = sbr.rel (0) target = $region9
    $region8: #{tpu_custom_call.1} parent=1 // pred_region
      _
    $region9: #{tpu_custom_call.1} parent=1 // pred_fallthru
      _
    // Predicated region
    $region10: #{tpu_custom_call.1} parent=1 // pred_check
      _
    $region11: #{tpu_custom_call.1} parent=1 // pred_check_branch
      %31 = sbr.rel (0) target = $region13
    $region12: #{tpu_custom_call.1} parent=1 // pred_region
      _
    $region13: #{tpu_custom_call.1} parent=1 // pred_fallthru
      _
    // Predicated region
    $region14: #{tpu_custom_call.1} parent=1 // pred_check
      _
    $region15: #{tpu_custom_call.1} parent=1 // pred_check_branch
      %33 = sbr.rel (0) target = $region17
    $region16: #{tpu_custom_call.1} parent=1 // pred_region
      _
    $region17: #{tpu_custom_call.1} parent=1 // pred_fallthru
      _
    // Predicated region
    $region18: #{tpu_custom_call.1} parent=1 // pred_check
      _
    $region19: #{tpu_custom_call.1} parent=1 // pred_check_branch
      %35 = sbr.rel (0) target = $region21
    $region20: #{tpu_custom_call.1} parent=1 // pred_region
      _
    $region21: #{tpu_custom_call.1} parent=1 // pred_fallthru
      _
    // Predicated region
    $region22: #{tpu_custom_call.1} parent=1 // pred_check
      _
    $region23: #{tpu_custom_call.1} parent=1 // pred_check_branch
      %37 = sbr.rel (0) target = $region25
    $region24: #{tpu_custom_call.1} parent=1 // pred_region
      _
    $region25: #{tpu_custom_call.1} parent=1 // pred_fallthru
      _
    // Predicated region
    $region26: #{tpu_custom_call.1} parent=1 // pred_check
      _
    $region27: #{tpu_custom_call.1} parent=1 // pred_check_branch
      %39 = sbr.rel (0) target = $region29
    $region28: #{tpu_custom_call.1} parent=1 // pred_region
      %s41 = ssub.s32 512, 512
      %42 = vsyncadd [#allocation7], %s41
      %s43 = sshll.u32 [#allocation6], 4
      %s44 = int_to_ptr.vmem [resolvable:$true] %s43
      %49 = dma.hbm_to_vmem [thread:$0]  %s6, 512, %s44, [#allocation7], 128, 128, 8
    $region29: #{tpu_custom_call.1} parent=1 // pred_fallthru
      _
    // Predicated region
    $region30: #{tpu_custom_call.1} parent=1 // pred_check
      _
    $region31: #{tpu_custom_call.1} parent=1 // pred_check_branch
      %51 = sbr.rel (0) target = $region33
    $region32: #{tpu_custom_call.1} parent=1 // pred_region
      _
    $region33: #{tpu_custom_call.1} parent=1 // pred_fallthru
      _
    // Predicated region
    $region34: #{tpu_custom_call.1} parent=1 // pred_check
      _
    $region35: #{tpu_custom_call.1} parent=1 // pred_check_branch
      %53 = sbr.rel (0) target = $region37
    $region36: #{tpu_custom_call.1} parent=1 // pred_region
      %54 = dma.done [#allocation4], 256
    $region37: #{tpu_custom_call.1} parent=1 // pred_fallthru
      _
    // Predicated region
    $region38: #{tpu_custom_call.1} parent=1 // pred_check
      _
    $region39: #{tpu_custom_call.1} parent=1 // pred_check_branch
      %56 = sbr.rel (0) target = $region41
    $region40: #{tpu_custom_call.1} parent=1 // pred_region
      %57 = dma.done [#allocation7], 512
    $region41: #{tpu_custom_call.1} parent=1 // pred_fallthru
      _
    %p58 = scmp.eq.s32.totalorder 0, 0
    // Predicated region
    $region42: #{tpu_custom_call.1} parent=1 // pred_check
      %p59 = pneg %p58
    $region43: #{tpu_custom_call.1} parent=1 // pred_check_branch
      %61 = sbr.rel (%p59) target = $region45
    $region44: #{tpu_custom_call.1} parent=1 // pred_region
      %vm62 = vcmask 261120
      %63 = vst.msk [vmem:[#allocation2] sm:$0xff] %vm62, 0.0
    $region45: #{tpu_custom_call.1} parent=1 // pred_fallthru
      _
    %v64 = vlaneseq
    %v65 = vand.u32 %v64, 127
    %s66 = smul.u32 0, 16
    %v67 = vstv %s66
    %v68 = vadd.s32 %v65, %v67
    %v69 = vld [vmem:[%s1] sm:$0xff]
    %70 = vset.pattern.permute.xlu0 0
    %71 = vperm.xlu0 %70, %v69
    %v72 = vpop.permute.xlu0 %71
    %vm73 = vcmp.ge.s32.totalorder %v68, %v72
    %v74 = vld [vmem:[%s2] sm:$0xff]
    %75 = vset.pattern.permute.xlu0 0
    %76 = vperm.xlu0 %75, %v74
    %v77 = vpop.permute.xlu0 %76
    %vm78 = vcmp.lt.s32.totalorder %v68, %v77
    %vm79 = vmand %vm73, %vm78
    %v80 = vsel %vm79, 1, 0
    %v81 = vcvt.s32.f32 %v80
    %v82 = vld [vmem:[#allocation2] sm:$0xff]
    %v83 = vld [vmem:[#allocation3] sm:$0xff]
    %v84 = vld [vmem:[#allocation3 + $0x8] sm:$0xff]
    %vm85 = vcmask 130048
    %v87 = vsel %vm85, %v81, 0
    %89 = vmatprep.subr.mxu0 0.0
    %90 = vmatpush1.msra.mxu0 0.0
    %91 = vmatprep.subr.mxu0 0.0
    %92 = vmatpush1.msra.mxu0 0.0
    %93 = vmatprep.subr.mxu0 0.0
    %94 = vmatpush1.msra.mxu0 0.0
    %95 = vmatprep.subr.mxu0 0.0
    %96 = vmatpush1.msra.mxu0 0.0
    %97 = vmatprep.subr.mxu0 0.0
    %98 = vmatpush1.msra.mxu0 0.0
    %99 = vmatprep.subr.mxu0 0.0
    %100 = vmatpush1.msra.mxu0 0.0
    %101 = vmatprep.subr.mxu0 0.0
    %102 = vmatpush1.msra.mxu0 0.0
    %103 = vmatprep.subr.mxu0 0.0
    %104 = vmatpush1.msra.mxu0 0.0
    %105 = vmatprep.subr.mxu0 0.0
    %106 = vmatpush1.msra.mxu0 0.0
    %107 = vmatprep.subr.mxu0 0.0
    %108 = vmatpush1.msra.mxu0 0.0
    %109 = vmatprep.subr.mxu0 0.0
    %110 = vmatpush1.msra.mxu0 0.0
    %111 = vmatprep.subr.mxu0 0.0
    %112 = vmatpush1.msra.mxu0 0.0
    %113 = vmatprep.subr.mxu0 0.0
    %114 = vmatpush1.msra.mxu0 0.0
    %115 = vmatprep.subr.mxu0 0.0
    %116 = vmatpush1.msra.mxu0 0.0
    %117 = vmatprep.subr.mxu0 0.0
    %118 = vmatpush1.msra.mxu0 %v84
    %119 = vmatprep.subr.mxu0 0.0
    %120 = vmatpush1.msra.mxu0 %v83
    %121 = vmatprep.subr.mxu0 0.0
    %122 = vmatpush2.msra.mxu0 0.0
    %123 = vmatprep.subr.mxu0 0.0
    %124 = vmatpush2.msra.mxu0 0.0
    %125 = vmatprep.subr.mxu0 0.0
    %126 = vmatpush2.msra.mxu0 0.0
    %127 = vmatprep.subr.mxu0 0.0
    %128 = vmatpush2.msra.mxu0 0.0
    %129 = vmatprep.subr.mxu0 0.0
    %130 = vmatpush2.msra.mxu0 0.0
    %131 = vmatprep.subr.mxu0 0.0
    %132 = vmatpush2.msra.mxu0 0.0
    %133 = vmatprep.subr.mxu0 0.0
    %134 = vmatpush2.msra.mxu0 0.0
    %135 = vmatprep.subr.mxu0 0.0
    %136 = vmatpush2.msra.mxu0 0.0
    %137 = vmatprep.subr.mxu0 0.0
    %138 = vmatpush2.msra.mxu0 0.0
    %139 = vmatprep.subr.mxu0 0.0
    %140 = vmatpush2.msra.mxu0 0.0
    %141 = vmatprep.subr.mxu0 0.0
    %142 = vmatpush2.msra.mxu0 0.0
    %143 = vmatprep.subr.mxu0 0.0
    %144 = vmatpush2.msra.mxu0 0.0
    %145 = vmatprep.subr.mxu0 0.0
    %146 = vmatpush2.msra.mxu0 0.0
    %147 = vmatprep.subr.mxu0 0.0
    %148 = vmatpush2.msra.mxu0 0.0
    %149 = vmatprep.subr.mxu0 0.0
    %150 = vmatpush2.msra.mxu0 0.0
    %151 = vmatprep.subr.mxu0 0.0
    %152 = vmatpush2.msra.mxu0 0.0
    %153 = vmatprep.mubr.f32.mxu0 0.0
    %154 = vmatmul.mubr.f32.gmra.mxu0 %v87
    %v155 = vpop.f32.mrf.mxu0
    %v156 = vadd.f32 0.0, %v155
    %v157 = vpop.f32.mrf.mxu0
    %158 = vdwg.mxu0
    %v159 = vadd.f32 %v82, %v156
    %vm160 = vcmask 261120
    %161 = vst.msk [vmem:[#allocation2] sm:$0xff] %vm160, %v159
    // Predicated region
    $region46: #{tpu_custom_call.1} parent=1 // pred_check
      %p162 = pneg %p58
    $region47: #{tpu_custom_call.1} parent=1 // pred_check_branch
      %164 = sbr.rel (%p162) target = $region49
    $region48: #{tpu_custom_call.1} parent=1 // pred_region
      %v165 = vld [vmem:[#allocation2] sm:$0xff]
      %v166 = vld [vmem:[%s3] sm:$0xff]
      %168 = vset.pattern.permute.xlu0 0
      %169 = vperm.xlu0 %168, %v166
      %v170 = vpop.permute.xlu0 %169
      %v172 = vmul.f32 %v165, %v170
      %v173 = vld [vmem:[%s4] sm:$0xff]
      %v174 = vld [vmem:[%s4 + $0x8] sm:$0xff]
      %v175 = vld [vmem:[%s4 + $0x10] sm:$0xff]
      %v176 = vld [vmem:[%s4 + $0x18] sm:$0xff]
      %v177 = vld [vmem:[%s5] sm:$0x1]
      %v179 = vlaneseq
      %v180 = vshrl.u32 %v179, 7
      %v181 = vsub.s32 0, %v180
      %v182 = vrot.slane %v177, %v181
      %v185 = vsel %vm160, %v172, 0
      %187 = vmatprep.subr.mxu0 0.0
      %188 = vmatpush1.msra.mxu0 0.0
      %189 = vmatprep.subr.mxu0 0.0
      %190 = vmatpush1.msra.mxu0 0.0
      %191 = vmatprep.subr.mxu0 0.0
      %192 = vmatpush1.msra.mxu0 0.0
      %193 = vmatprep.subr.mxu0 0.0
      %194 = vmatpush1.msra.mxu0 0.0
      %195 = vmatprep.subr.mxu0 0.0
      %196 = vmatpush1.msra.mxu0 0.0
      %197 = vmatprep.subr.mxu0 0.0
      %198 = vmatpush1.msra.mxu0 0.0
      %199 = vmatprep.subr.mxu0 0.0
      %200 = vmatpush1.msra.mxu0 0.0
      %201 = vmatprep.subr.mxu0 0.0
      %202 = vmatpush1.msra.mxu0 0.0
      %203 = vmatprep.subr.mxu0 0.0
      %204 = vmatpush1.msra.mxu0 0.0
      %205 = vmatprep.subr.mxu0 0.0
      %206 = vmatpush1.msra.mxu0 0.0
      %207 = vmatprep.subr.mxu0 0.0
      %208 = vmatpush1.msra.mxu0 0.0
      %209 = vmatprep.subr.mxu0 0.0
      %210 = vmatpush1.msra.mxu0 0.0
      %211 = vmatprep.subr.mxu0 0.0
      %212 = vmatpush1.msra.mxu0 %v176
      %213 = vmatprep.subr.mxu0 0.0
      %214 = vmatpush1.msra.mxu0 %v175
      %215 = vmatprep.subr.mxu0 0.0
      %216 = vmatpush1.msra.mxu0 %v174
      %217 = vmatprep.subr.mxu0 0.0
      %218 = vmatpush1.msra.mxu0 %v173
      %219 = vmatprep.subr.mxu0 0.0
      %220 = vmatpush2.msra.mxu0 0.0
      %221 = vmatprep.subr.mxu0 0.0
      %222 = vmatpush2.msra.mxu0 0.0
      %223 = vmatprep.subr.mxu0 0.0
      %224 = vmatpush2.msra.mxu0 0.0
      %225 = vmatprep.subr.mxu0 0.0
      %226 = vmatpush2.msra.mxu0 0.0
      %227 = vmatprep.subr.mxu0 0.0
      %228 = vmatpush2.msra.mxu0 0.0
      %229 = vmatprep.subr.mxu0 0.0
      %230 = vmatpush2.msra.mxu0 0.0
      %231 = vmatprep.subr.mxu0 0.0
      %232 = vmatpush2.msra.mxu0 0.0
      %233 = vmatprep.subr.mxu0 0.0
      %234 = vmatpush2.msra.mxu0 0.0
      %235 = vmatprep.subr.mxu0 0.0
      %236 = vmatpush2.msra.mxu0 0.0
      %237 = vmatprep.subr.mxu0 0.0
      %238 = vmatpush2.msra.mxu0 0.0
      %239 = vmatprep.subr.mxu0 0.0
      %240 = vmatpush2.msra.mxu0 0.0
      %241 = vmatprep.subr.mxu0 0.0
      %242 = vmatpush2.msra.mxu0 0.0
      %243 = vmatprep.subr.mxu0 0.0
      %244 = vmatpush2.msra.mxu0 0.0
      %245 = vmatprep.subr.mxu0 0.0
      %246 = vmatpush2.msra.mxu0 0.0
      %247 = vmatprep.subr.mxu0 0.0
      %248 = vmatpush2.msra.mxu0 0.0
      %249 = vmatprep.subr.mxu0 0.0
      %250 = vmatpush2.msra.mxu0 0.0
      %251 = vmatprep.mubr.f32.mxu0 0.0
      %252 = vmatmul.mubr.f32.gmra.mxu0 %v185
      %v253 = vpop.f32.mrf.mxu0
      %v254 = vadd.f32 %v182, %v253
      %v255 = vpop.f32.mrf.mxu0
      %256 = vdwg.mxu0
      %v257 = vmax.f32 %v254, 0.0
      %v258 = vld [vmem:[#allocation6] sm:$0xff]
      %v259 = vld [vmem:[#allocation6 + $0x8] sm:$0xff]
      %v260 = vld [vmem:[#allocation6 + $0x10] sm:$0xff]
      %v261 = vld [vmem:[#allocation6 + $0x18] sm:$0xff]
      %v262 = vld [vmem:[%s7] sm:$0x1]
      %v264 = vlaneseq
      %v265 = vshrl.u32 %v264, 7
      %v266 = vsub.s32 0, %v265
      %v267 = vrot.slane %v262, %v266
      %v270 = vsel %vm160, %v257, 0
      %272 = vmatprep.subr.mxu0 0.0
      %273 = vmatpush1.msra.mxu0 0.0
      %274 = vmatprep.subr.mxu0 0.0
      %275 = vmatpush1.msra.mxu0 0.0
      %276 = vmatprep.subr.mxu0 0.0
      %277 = vmatpush1.msra.mxu0 0.0
      %278 = vmatprep.subr.mxu0 0.0
      %279 = vmatpush1.msra.mxu0 0.0
      %280 = vmatprep.subr.mxu0 0.0
      %281 = vmatpush1.msra.mxu0 0.0
      %282 = vmatprep.subr.mxu0 0.0
      %283 = vmatpush1.msra.mxu0 0.0
      %284 = vmatprep.subr.mxu0 0.0
      %285 = vmatpush1.msra.mxu0 0.0
      %286 = vmatprep.subr.mxu0 0.0
      %287 = vmatpush1.msra.mxu0 0.0
      %288 = vmatprep.subr.mxu0 0.0
      %289 = vmatpush1.msra.mxu0 0.0
      %290 = vmatprep.subr.mxu0 0.0
      %291 = vmatpush1.msra.mxu0 0.0
      %292 = vmatprep.subr.mxu0 0.0
      %293 = vmatpush1.msra.mxu0 0.0
      %294 = vmatprep.subr.mxu0 0.0
      %295 = vmatpush1.msra.mxu0 0.0
      %296 = vmatprep.subr.mxu0 0.0
      %297 = vmatpush1.msra.mxu0 %v261
      %298 = vmatprep.subr.mxu0 0.0
      %299 = vmatpush1.msra.mxu0 %v260
      %300 = vmatprep.subr.mxu0 0.0
      %301 = vmatpush1.msra.mxu0 %v259
      %302 = vmatprep.subr.mxu0 0.0
      %303 = vmatpush1.msra.mxu0 %v258
      %304 = vmatprep.subr.mxu0 0.0
      %305 = vmatpush2.msra.mxu0 0.0
      %306 = vmatprep.subr.mxu0 0.0
      %307 = vmatpush2.msra.mxu0 0.0
      %308 = vmatprep.subr.mxu0 0.0
      %309 = vmatpush2.msra.mxu0 0.0
      %310 = vmatprep.subr.mxu0 0.0
      %311 = vmatpush2.msra.mxu0 0.0
      %312 = vmatprep.subr.mxu0 0.0
      %313 = vmatpush2.msra.mxu0 0.0
      %314 = vmatprep.subr.mxu0 0.0
      %315 = vmatpush2.msra.mxu0 0.0
      %316 = vmatprep.subr.mxu0 0.0
      %317 = vmatpush2.msra.mxu0 0.0
      %318 = vmatprep.subr.mxu0 0.0
      %319 = vmatpush2.msra.mxu0 0.0
      %320 = vmatprep.subr.mxu0 0.0
      %321 = vmatpush2.msra.mxu0 0.0
      %322 = vmatprep.subr.mxu0 0.0
      %323 = vmatpush2.msra.mxu0 0.0
      %324 = vmatprep.subr.mxu0 0.0
      %325 = vmatpush2.msra.mxu0 0.0
      %326 = vmatprep.subr.mxu0 0.0
      %327 = vmatpush2.msra.mxu0 0.0
      %328 = vmatprep.subr.mxu0 0.0
      %329 = vmatpush2.msra.mxu0 0.0
      %330 = vmatprep.subr.mxu0 0.0
      %331 = vmatpush2.msra.mxu0 0.0
      %332 = vmatprep.subr.mxu0 0.0
      %333 = vmatpush2.msra.mxu0 0.0
      %334 = vmatprep.subr.mxu0 0.0
      %335 = vmatpush2.msra.mxu0 0.0
      %336 = vmatprep.mubr.f32.mxu0 0.0
      %337 = vmatmul.mubr.f32.gmra.mxu0 %v270
      %v338 = vpop.f32.mrf.mxu0
      %v339 = vadd.f32 %v267, %v338
      %v340 = vpop.f32.mrf.mxu0
      %341 = vdwg.mxu0
      %342 = vst.msk [vmem:[#allocation8] sm:$0xff] %vm160, %v339
    $region49: #{tpu_custom_call.1} parent=1 // pred_fallthru
      _
    // Predicated region
    $region50: #{tpu_custom_call.1} parent=1 // pred_check
      _
    $region51: #{tpu_custom_call.1} parent=1 // pred_check_branch
      %344 = sbr.rel (0) target = $region53
    $region52: #{tpu_custom_call.1} parent=1 // pred_region
      %s346 = ssub.s32 128, 128
      %347 = vsyncadd [#allocation5], %s346
      %s349 = sshll.u32 [#allocation8], 4
      %s350 = int_to_ptr.vmem [resolvable:$true] %s349
      %352 = dma.vmem_to_hbm [thread:$0]  %s350, 128, %s8, [#allocation5]
    $region53: #{tpu_custom_call.1} parent=1 // pred_fallthru
      _
    // Predicated region
    $region54: #{tpu_custom_call.1} parent=1 // pred_check
      _
    $region55: #{tpu_custom_call.1} parent=1 // pred_check_branch
      %354 = sbr.rel (0) target = $region57
    $region56: #{tpu_custom_call.1} parent=1 // pred_region
      %355 = dma.done [#allocation5], 128
    $region57: #{tpu_custom_call.1} parent=1 // pred_fallthru
      _
    %356 = vsyncpa [#allocation4], 1
    %357 = vsyncpa [#allocation7], 1
    %358 = vsyncpa [#allocation5], 1

</llo_original>
